<compile_context>
chip_gen: v7x
topology: tpu7x:2x2x1
jax: 0.10.0
libtpu: 0.0.40
codegen_flags: <defaults>
</compile_context>

<pallas_src>
import functools
import math

import jax
import jax.numpy as jnp
from jax.experimental import pallas as pl
from jax.experimental.pallas import tpu as pltpu

_COEFF = 0.01  # DERLoss(coeff=0.01) default

_HALF_LOG_PI = 0.5 * math.log(math.pi)
_HALF_LOG_2PI = 0.5 * math.log(2.0 * math.pi)

# ---- Lanczos lgamma (g=7, 9 coefficients), folded into one rational -------
_LANCZOS_G = 7.0
_LANCZOS_COEF = (
    0.99999999999980993,
    676.5203681218851,
    -1259.1392167224028,
    771.32342877765313,
    -176.61502916214059,
    12.507343278686905,
    -0.13857109526572012,
    9.9843695780195716e-6,
    1.5056327351493116e-7,
)


def _poly_mul(p, q):
    out = [0.0] * (len(p) + len(q) - 1)
    for i, a in enumerate(p):
        for j, b in enumerate(q):
            out[i + j] += a * b
    return out


def _poly_add(p, q):
    n = max(len(p), len(q))
    p = list(p) + [0.0] * (n - len(p))
    q = list(q) + [0.0] * (n - len(q))
    return [a + b for a, b in zip(p, q)]


# sum_{i=1..8} c_i / (z + i)  ==  P(z) / Q(z)   with  Q(z) = prod_{i=1..8}(z+i)
# (coefficients computed once in double precision at import time).
_Q_COEFS = [1.0]
for _i in range(1, 9):
    _Q_COEFS = _poly_mul(_Q_COEFS, [float(_i), 1.0])
_P_COEFS = [0.0]
for _i in range(1, 9):
    _term = [_LANCZOS_COEF[_i]]
    for _j in range(1, 9):
        if _j != _i:
            _term = _poly_mul(_term, [float(_j), 1.0])
    _P_COEFS = _poly_add(_P_COEFS, _term)


def _horner(coefs, z):
    # coefs are low->high-order python floats; evaluated with VPU FMAs.
    acc = jnp.full_like(z, coefs[-1])
    for c in coefs[-2::-1]:
        acc = acc * z + c
    return acc


def _lgamma_pos(x):
    """Elementwise lgamma for strictly positive x (no reflection branch)."""
    z = x - 1.0
    a = _LANCZOS_COEF[0] + _horner(_P_COEFS, z) / _horner(_Q_COEFS, z)
    t = z + _LANCZOS_G + 0.5
    return _HALF_LOG_2PI + (z + 0.5) * jnp.log(t) - t + jnp.log(a)


def _der_loss_kernel(yp_ref, yt_ref, out_ref, *, batch, coeff, r_tile):
    i = pl.program_id(0)

    gamma = yp_ref[0]          # (r_tile, 128)
    nu = yp_ref[1]
    alpha = yp_ref[2]
    beta = yp_ref[3]
    y = yt_ref[...]            # (r_tile, 128)

    error = gamma - y
    omega = 2.0 * beta * (1.0 + nu)

    loss = (
        _HALF_LOG_PI - 0.5 * jnp.log(nu)          # == 0.5*log(pi/nu), 1 less div
        - alpha * jnp.log(omega)
        + (alpha + 0.5) * jnp.log(error * error * nu + omega)
        + _lgamma_pos(alpha)
        - _lgamma_pos(alpha + 0.5)
        + coeff * jnp.abs(error) * (2.0 * nu + alpha)
    )

    def _partial_sum(x):
        # (r_tile, 128) -> (8, 128) partial sums: pure VPU adds, no XLU tree.
        return jnp.sum(x.reshape(r_tile // 8, 8, 128), axis=0)

    last = pl.num_programs(0) - 1

    @pl.when(i != last)
    def _():
        out_ref[0] = _partial_sum(loss)

    @pl.when(i == last)
    def _():
        # Only the last block can contain batch padding -> mask it only here.
        row = jax.lax.broadcasted_iota(jnp.int32, (r_tile, 128), 0)
        lane = jax.lax.broadcasted_iota(jnp.int32, (r_tile, 128), 1)
        idx = (i * r_tile + row) * 128 + lane
        out_ref[0] = _partial_sum(jnp.where(idx < batch, loss, 0.0))


def der_loss(y_pred, y_true, coeff=_COEFF, r_tile=512):
    """Pallas DER loss.  y_pred: [B, 4], y_true: [B, 1] (or [B])."""
    B = int(y_pred.shape[0])

    rows = -(-B // 128)                       # 128-lane rows needed
    rows8 = -(-rows // 8) * 8                 # round rows up to a sublane tile
    r_tile = max(8, (min(int(r_tile), rows8) // 8) * 8)
    r_pad = -(-rows8 // r_tile) * r_tile
    b_pad = r_pad * 128
    n_blocks = r_pad // r_tile

    yp = jnp.asarray(y_pred, jnp.float32)
    yt = jnp.asarray(y_true, jnp.float32).reshape(B)   # == y_true.squeeze(-1)

    # Pad batch with safe positive values (masked in-kernel on the last block),
    # then lay it out sublane/lane-dense: [4, R_pad, 128] and [R_pad, 128].
    yp_t = jnp.pad(yp, ((0, b_pad - B), (0, 0)), constant_values=1.0).T
    yp_t = yp_t.reshape(4, r_pad, 128)
    yt_p = jnp.pad(yt, (0, b_pad - B)).reshape(r_pad, 128)

    kernel = functools.partial(
        _der_loss_kernel, batch=B, coeff=float(coeff), r_tile=r_tile)

    cost = pl.CostEstimate(
        flops=60 * b_pad,                    # 2x Horner(~15 FMA) + loss algebra
        transcendentals=9 * b_pad,           # ~7 logs + 2 divides per element
        bytes_accessed=4 * (5 * b_pad + n_blocks * 8 * 128),
    )

    partial = pl.pallas_call(
        kernel,
        out_shape=jax.ShapeDtypeStruct((n_blocks, 8, 128), jnp.float32),
        grid_spec=pltpu.PrefetchScalarGridSpec(
            num_scalar_prefetch=0,
            grid=(n_blocks,),
            in_specs=[
                pl.BlockSpec((4, r_tile, 128), lambda i: (0, i, 0)),
                pl.BlockSpec((r_tile, 128), lambda i: (i, 0)),
            ],
            out_specs=pl.BlockSpec((1, 8, 128), lambda i: (i, 0, 0)),
        ),
        compiler_params=pltpu.CompilerParams(
            dimension_semantics=("parallel",),
        ),
        cost_estimate=cost,
    )(yp_t, yt_p)

    return jnp.sum(partial) / B


def der_loss_ref(y_pred, y_true, coeff=_COEFF):
    """Pure-JAX reference (mirrors the PyTorch forward exactly)."""
    y = jnp.asarray(y_true, jnp.float32).squeeze(-1)
    yp = jnp.asarray(y_pred, jnp.float32)
    gamma, nu, alpha, beta = yp[:, 0], yp[:, 1], yp[:, 2], yp[:, 3]
    error = gamma - y
    omega = 2.0 * beta * (1.0 + nu)
    return jnp.mean(
        0.5 * jnp.log(jnp.pi / nu)
        - alpha * jnp.log(omega)
        + (alpha + 0.5) * jnp.log(error**2 * nu + omega)
        + jax.scipy.special.gammaln(alpha)
        - jax.scipy.special.gammaln(alpha + 0.5)
        + coeff * jnp.abs(error) * (2.0 * nu + alpha)
    )


def _make_inputs(key, batch):
    k1, k2 = jax.random.split(key)
    raw = jax.random.normal(k1, (batch, 4), dtype=jnp.float32)
    gamma = raw[:, 0]
    nu = jax.nn.softplus(raw[:, 1]) + 0.1    # nu > 0
    alpha = jax.nn.softplus(raw[:, 2]) + 1.0  # alpha > 1
    beta = jax.nn.softplus(raw[:, 3]) + 0.1   # beta > 0
    y_pred = jnp.stack([gamma, nu, alpha, beta], axis=1)   # [B, 4]
    y_true = jax.random.normal(k2, (batch, 1), dtype=jnp.float32)
    return y_pred, y_true


if __name__ == "__main__":
    key = jax.random.PRNGKey(0)
    k_a, k_b = jax.random.split(key)

    # Small single-block case (spec shape: [B, 4] / [B, 1]).
    y_pred, y_true = _make_inputs(k_a, 8)
    out = jax.block_until_ready(der_loss(y_pred, y_true))
    ref = der_loss_ref(y_pred, y_true)
    assert jnp.allclose(out, ref, atol=2e-3, rtol=2e-3), (out, ref)

    # Multi-block case exercising the parallel grid + last-block masking.
    y_pred2, y_true2 = _make_inputs(k_b, 2176)
    out2 = jax.block_until_ready(der_loss(y_pred2, y_true2, r_tile=8))
    ref2 = der_loss_ref(y_pred2, y_true2)
    assert jnp.allclose(out2, ref2, atol=2e-3, rtol=2e-3), (out2, ref2)

    print("KERNEL_OK")
</pallas_src>

<mosaic_0001>
module attributes {stable_mosaic.version = 11 : i64} {
  func.func @_der_loss_kernel(%arg0: i32, %arg1: memref<4x8x128xf32, #tpu.memory_space<vmem>>, %arg2: memref<8x128xf32, #tpu.memory_space<vmem>>, %arg3: memref<1x8x128xf32, #tpu.memory_space<vmem>>) attributes {dimension_semantics = [#tpu.dimension_semantics<parallel>], iteration_bounds = array<i64: 1>, scalar_prefetch = 0 : i64, scratch_operands = 0 : i64, tpu.core_type = #tpu.core_type<tc>, window_params = [{transform_indices = @transform_0, window_bounds = array<i64: 4, 8, 128>}, {transform_indices = @transform_1, window_bounds = array<i64: 8, 128>}, {transform_indices = @transform_2, window_bounds = array<i64: 1, 8, 128>}]} {
    %c0 = arith.constant 0 : index
    %c0_0 = arith.constant 0 : index
    %c0_1 = arith.constant 0 : index
    %0 = vector.load %arg1[%c0, %c0_0, %c0_1] : memref<4x8x128xf32, #tpu.memory_space<vmem>>, vector<1x8x128xf32>
    %1 = vector.shape_cast %0 : vector<1x8x128xf32> to vector<8x128xf32>
    %c1 = arith.constant 1 : index
    %c0_2 = arith.constant 0 : index
    %c0_3 = arith.constant 0 : index
    %2 = vector.load %arg1[%c1, %c0_2, %c0_3] : memref<4x8x128xf32, #tpu.memory_space<vmem>>, vector<1x8x128xf32>
    %3 = vector.shape_cast %2 : vector<1x8x128xf32> to vector<8x128xf32>
    %c2 = arith.constant 2 : index
    %c0_4 = arith.constant 0 : index
    %c0_5 = arith.constant 0 : index
    %4 = vector.load %arg1[%c2, %c0_4, %c0_5] : memref<4x8x128xf32, #tpu.memory_space<vmem>>, vector<1x8x128xf32>
    %5 = vector.shape_cast %4 : vector<1x8x128xf32> to vector<8x128xf32>
    %c3 = arith.constant 3 : index
    %c0_6 = arith.constant 0 : index
    %c0_7 = arith.constant 0 : index
    %6 = vector.load %arg1[%c3, %c0_6, %c0_7] : memref<4x8x128xf32, #tpu.memory_space<vmem>>, vector<1x8x128xf32>
    %7 = vector.shape_cast %6 : vector<1x8x128xf32> to vector<8x128xf32>
    %c0_8 = arith.constant 0 : index
    %c0_9 = arith.constant 0 : index
    %8 = vector.load %arg2[%c0_8, %c0_9] : memref<8x128xf32, #tpu.memory_space<vmem>>, vector<8x128xf32>
    %9 = arith.subf %1, %8 : vector<8x128xf32>
    %cst = arith.constant 2.000000e+00 : f32
    %10 = vector.broadcast %cst : f32 to vector<8x128xf32>
    %11 = arith.mulf %10, %7 : vector<8x128xf32>
    %cst_10 = arith.constant 1.000000e+00 : f32
    %12 = vector.broadcast %cst_10 : f32 to vector<8x128xf32>
    %13 = arith.addf %12, %3 : vector<8x128xf32>
    %14 = arith.mulf %11, %13 : vector<8x128xf32>
    %15 = math.log %3 : vector<8x128xf32>
    %cst_11 = arith.constant 5.000000e-01 : f32
    %16 = vector.broadcast %cst_11 : f32 to vector<8x128xf32>
    %17 = arith.mulf %16, %15 : vector<8x128xf32>
    %cst_12 = arith.constant 0.572364926 : f32
    %18 = vector.broadcast %cst_12 : f32 to vector<8x128xf32>
    %19 = arith.subf %18, %17 : vector<8x128xf32>
    %20 = math.log %14 : vector<8x128xf32>
    %21 = arith.mulf %5, %20 : vector<8x128xf32>
    %22 = arith.subf %19, %21 : vector<8x128xf32>
    %cst_13 = arith.constant 5.000000e-01 : f32
    %23 = vector.broadcast %cst_13 : f32 to vector<8x128xf32>
    %24 = arith.addf %5, %23 : vector<8x128xf32>
    %25 = arith.mulf %9, %9 : vector<8x128xf32>
    %26 = arith.mulf %25, %3 : vector<8x128xf32>
    %27 = arith.addf %26, %14 : vector<8x128xf32>
    %28 = math.log %27 : vector<8x128xf32>
    %29 = arith.mulf %24, %28 : vector<8x128xf32>
    %30 = arith.addf %22, %29 : vector<8x128xf32>
    %cst_14 = arith.constant 1.000000e+00 : f32
    %31 = vector.broadcast %cst_14 : f32 to vector<8x128xf32>
    %32 = arith.subf %5, %31 : vector<8x128xf32>
    %cst_15 = arith.constant 24.458334 : f32
    %33 = vector.broadcast %cst_15 : f32 to vector<8x128xf32>
    %34 = arith.mulf %33, %32 : vector<8x128xf32>
    %cst_16 = arith.constant 1053.04248 : f32
    %35 = vector.broadcast %cst_16 : f32 to vector<8x128xf32>
    %36 = arith.addf %34, %35 : vector<8x128xf32>
    %37 = arith.mulf %36, %32 : vector<8x128xf32>
    %cst_17 = arith.constant 19629.5098 : f32
    %38 = vector.broadcast %cst_17 : f32 to vector<8x128xf32>
    %39 = arith.addf %37, %38 : vector<8x128xf32>
    %40 = arith.mulf %39, %32 : vector<8x128xf32>
    %cst_18 = arith.constant 205786.219 : f32
    %41 = vector.broadcast %cst_18 : f32 to vector<8x128xf32>
    %42 = arith.addf %40, %41 : vector<8x128xf32>
    %43 = arith.mulf %42, %32 : vector<8x128xf32>
    %cst_19 = arith.constant 1312212.25 : f32
    %44 = vector.broadcast %cst_19 : f32 to vector<8x128xf32>
    %45 = arith.addf %43, %44 : vector<8x128xf32>
    %46 = arith.mulf %45, %32 : vector<8x128xf32>
    %cst_20 = arith.constant 0x4A9B6B12 : f32
    %47 = vector.broadcast %cst_20 : f32 to vector<8x128xf32>
    %48 = arith.addf %46, %47 : vector<8x128xf32>
    %49 = arith.mulf %48, %32 : vector<8x128xf32>
    %cst_21 = arith.constant 0x4B29F141 : f32
    %50 = vector.broadcast %cst_21 : f32 to vector<8x128xf32>
    %51 = arith.addf %49, %50 : vector<8x128xf32>
    %52 = arith.mulf %51, %32 : vector<8x128xf32>
    %cst_22 = arith.constant 0x4B216D5A : f32
    %53 = vector.broadcast %cst_22 : f32 to vector<8x128xf32>
    %54 = arith.addf %52, %53 : vector<8x128xf32>
    %cst_23 = arith.constant 1.000000e+00 : f32
    %55 = vector.broadcast %cst_23 : f32 to vector<8x128xf32>
    %56 = arith.mulf %55, %32 : vector<8x128xf32>
    %cst_24 = arith.constant 3.600000e+01 : f32
    %57 = vector.broadcast %cst_24 : f32 to vector<8x128xf32>
    %58 = arith.addf %56, %57 : vector<8x128xf32>
    %59 = arith.mulf %58, %32 : vector<8x128xf32>
    %cst_25 = arith.constant 5.460000e+02 : f32
    %60 = vector.broadcast %cst_25 : f32 to vector<8x128xf32>
    %61 = arith.addf %59, %60 : vector<8x128xf32>
    %62 = arith.mulf %61, %32 : vector<8x128xf32>
    %cst_26 = arith.constant 4.536000e+03 : f32
    %63 = vector.broadcast %cst_26 : f32 to vector<8x128xf32>
    %64 = arith.addf %62, %63 : vector<8x128xf32>
    %65 = arith.mulf %64, %32 : vector<8x128xf32>
    %cst_27 = arith.constant 2.244900e+04 : f32
    %66 = vector.broadcast %cst_27 : f32 to vector<8x128xf32>
    %67 = arith.addf %65, %66 : vector<8x128xf32>
    %68 = arith.mulf %67, %32 : vector<8x128xf32>
    %cst_28 = arith.constant 6.728400e+04 : f32
    %69 = vector.broadcast %cst_28 : f32 to vector<8x128xf32>
    %70 = arith.addf %68, %69 : vector<8x128xf32>
    %71 = arith.mulf %70, %32 : vector<8x128xf32>
    %cst_29 = arith.constant 1.181240e+05 : f32
    %72 = vector.broadcast %cst_29 : f32 to vector<8x128xf32>
    %73 = arith.addf %71, %72 : vector<8x128xf32>
    %74 = arith.mulf %73, %32 : vector<8x128xf32>
    %cst_30 = arith.constant 1.095840e+05 : f32
    %75 = vector.broadcast %cst_30 : f32 to vector<8x128xf32>
    %76 = arith.addf %74, %75 : vector<8x128xf32>
    %77 = arith.mulf %76, %32 : vector<8x128xf32>
    %cst_31 = arith.constant 4.032000e+04 : f32
    %78 = vector.broadcast %cst_31 : f32 to vector<8x128xf32>
    %79 = arith.addf %77, %78 : vector<8x128xf32>
    %80 = arith.divf %54, %79 : vector<8x128xf32>
    %cst_32 = arith.constant 1.000000e+00 : f32
    %81 = vector.broadcast %cst_32 : f32 to vector<8x128xf32>
    %82 = arith.addf %81, %80 : vector<8x128xf32>
    %cst_33 = arith.constant 7.000000e+00 : f32
    %83 = vector.broadcast %cst_33 : f32 to vector<8x128xf32>
    %84 = arith.addf %32, %83 : vector<8x128xf32>
    %cst_34 = arith.constant 5.000000e-01 : f32
    %85 = vector.broadcast %cst_34 : f32 to vector<8x128xf32>
    %86 = arith.addf %84, %85 : vector<8x128xf32>
    %cst_35 = arith.constant 5.000000e-01 : f32
    %87 = vector.broadcast %cst_35 : f32 to vector<8x128xf32>
    %88 = arith.addf %32, %87 : vector<8x128xf32>
    %89 = math.log %86 : vector<8x128xf32>
    %90 = arith.mulf %88, %89 : vector<8x128xf32>
    %cst_36 = arith.constant 0.918938517 : f32
    %91 = vector.broadcast %cst_36 : f32 to vector<8x128xf32>
    %92 = arith.addf %91, %90 : vector<8x128xf32>
    %93 = arith.subf %92, %86 : vector<8x128xf32>
    %94 = math.log %82 : vector<8x128xf32>
    %95 = arith.addf %93, %94 : vector<8x128xf32>
    %96 = arith.addf %30, %95 : vector<8x128xf32>
    %cst_37 = arith.constant 5.000000e-01 : f32
    %97 = vector.broadcast %cst_37 : f32 to vector<8x128xf32>
    %98 = arith.addf %5, %97 : vector<8x128xf32>
    %cst_38 = arith.constant 1.000000e+00 : f32
    %99 = vector.broadcast %cst_38 : f32 to vector<8x128xf32>
    %100 = arith.subf %98, %99 : vector<8x128xf32>
    %cst_39 = arith.constant 24.458334 : f32
    %101 = vector.broadcast %cst_39 : f32 to vector<8x128xf32>
    %102 = arith.mulf %101, %100 : vector<8x128xf32>
    %cst_40 = arith.constant 1053.04248 : f32
    %103 = vector.broadcast %cst_40 : f32 to vector<8x128xf32>
    %104 = arith.addf %102, %103 : vector<8x128xf32>
    %105 = arith.mulf %104, %100 : vector<8x128xf32>
    %cst_41 = arith.constant 19629.5098 : f32
    %106 = vector.broadcast %cst_41 : f32 to vector<8x128xf32>
    %107 = arith.addf %105, %106 : vector<8x128xf32>
    %108 = arith.mulf %107, %100 : vector<8x128xf32>
    %cst_42 = arith.constant 205786.219 : f32
    %109 = vector.broadcast %cst_42 : f32 to vector<8x128xf32>
    %110 = arith.addf %108, %109 : vector<8x128xf32>
    %111 = arith.mulf %110, %100 : vector<8x128xf32>
    %cst_43 = arith.constant 1312212.25 : f32
    %112 = vector.broadcast %cst_43 : f32 to vector<8x128xf32>
    %113 = arith.addf %111, %112 : vector<8x128xf32>
    %114 = arith.mulf %113, %100 : vector<8x128xf32>
    %cst_44 = arith.constant 0x4A9B6B12 : f32
    %115 = vector.broadcast %cst_44 : f32 to vector<8x128xf32>
    %116 = arith.addf %114, %115 : vector<8x128xf32>
    %117 = arith.mulf %116, %100 : vector<8x128xf32>
    %cst_45 = arith.constant 0x4B29F141 : f32
    %118 = vector.broadcast %cst_45 : f32 to vector<8x128xf32>
    %119 = arith.addf %117, %118 : vector<8x128xf32>
    %120 = arith.mulf %119, %100 : vector<8x128xf32>
    %cst_46 = arith.constant 0x4B216D5A : f32
    %121 = vector.broadcast %cst_46 : f32 to vector<8x128xf32>
    %122 = arith.addf %120, %121 : vector<8x128xf32>
    %cst_47 = arith.constant 1.000000e+00 : f32
    %123 = vector.broadcast %cst_47 : f32 to vector<8x128xf32>
    %124 = arith.mulf %123, %100 : vector<8x128xf32>
    %cst_48 = arith.constant 3.600000e+01 : f32
    %125 = vector.broadcast %cst_48 : f32 to vector<8x128xf32>
    %126 = arith.addf %124, %125 : vector<8x128xf32>
    %127 = arith.mulf %126, %100 : vector<8x128xf32>
    %cst_49 = arith.constant 5.460000e+02 : f32
    %128 = vector.broadcast %cst_49 : f32 to vector<8x128xf32>
    %129 = arith.addf %127, %128 : vector<8x128xf32>
    %130 = arith.mulf %129, %100 : vector<8x128xf32>
    %cst_50 = arith.constant 4.536000e+03 : f32
    %131 = vector.broadcast %cst_50 : f32 to vector<8x128xf32>
    %132 = arith.addf %130, %131 : vector<8x128xf32>
    %133 = arith.mulf %132, %100 : vector<8x128xf32>
    %cst_51 = arith.constant 2.244900e+04 : f32
    %134 = vector.broadcast %cst_51 : f32 to vector<8x128xf32>
    %135 = arith.addf %133, %134 : vector<8x128xf32>
    %136 = arith.mulf %135, %100 : vector<8x128xf32>
    %cst_52 = arith.constant 6.728400e+04 : f32
    %137 = vector.broadcast %cst_52 : f32 to vector<8x128xf32>
    %138 = arith.addf %136, %137 : vector<8x128xf32>
    %139 = arith.mulf %138, %100 : vector<8x128xf32>
    %cst_53 = arith.constant 1.181240e+05 : f32
    %140 = vector.broadcast %cst_53 : f32 to vector<8x128xf32>
    %141 = arith.addf %139, %140 : vector<8x128xf32>
    %142 = arith.mulf %141, %100 : vector<8x128xf32>
    %cst_54 = arith.constant 1.095840e+05 : f32
    %143 = vector.broadcast %cst_54 : f32 to vector<8x128xf32>
    %144 = arith.addf %142, %143 : vector<8x128xf32>
    %145 = arith.mulf %144, %100 : vector<8x128xf32>
    %cst_55 = arith.constant 4.032000e+04 : f32
    %146 = vector.broadcast %cst_55 : f32 to vector<8x128xf32>
    %147 = arith.addf %145, %146 : vector<8x128xf32>
    %148 = arith.divf %122, %147 : vector<8x128xf32>
    %cst_56 = arith.constant 1.000000e+00 : f32
    %149 = vector.broadcast %cst_56 : f32 to vector<8x128xf32>
    %150 = arith.addf %149, %148 : vector<8x128xf32>
    %cst_57 = arith.constant 7.000000e+00 : f32
    %151 = vector.broadcast %cst_57 : f32 to vector<8x128xf32>
    %152 = arith.addf %100, %151 : vector<8x128xf32>
    %cst_58 = arith.constant 5.000000e-01 : f32
    %153 = vector.broadcast %cst_58 : f32 to vector<8x128xf32>
    %154 = arith.addf %152, %153 : vector<8x128xf32>
    %cst_59 = arith.constant 5.000000e-01 : f32
    %155 = vector.broadcast %cst_59 : f32 to vector<8x128xf32>
    %156 = arith.addf %100, %155 : vector<8x128xf32>
    %157 = math.log %154 : vector<8x128xf32>
    %158 = arith.mulf %156, %157 : vector<8x128xf32>
    %cst_60 = arith.constant 0.918938517 : f32
    %159 = vector.broadcast %cst_60 : f32 to vector<8x128xf32>
    %160 = arith.addf %159, %158 : vector<8x128xf32>
    %161 = arith.subf %160, %154 : vector<8x128xf32>
    %162 = math.log %150 : vector<8x128xf32>
    %163 = arith.addf %161, %162 : vector<8x128xf32>
    %164 = arith.subf %96, %163 : vector<8x128xf32>
    %165 = math.absf %9 : vector<8x128xf32>
    %cst_61 = arith.constant 0.00999999977 : f32
    %166 = vector.broadcast %cst_61 : f32 to vector<8x128xf32>
    %167 = arith.mulf %166, %165 : vector<8x128xf32>
    %cst_62 = arith.constant 2.000000e+00 : f32
    %168 = vector.broadcast %cst_62 : f32 to vector<8x128xf32>
    %169 = arith.mulf %168, %3 : vector<8x128xf32>
    %170 = arith.addf %169, %5 : vector<8x128xf32>
    %171 = arith.mulf %167, %170 : vector<8x128xf32>
    %172 = arith.addf %164, %171 : vector<8x128xf32>
    %c0_i32 = arith.constant 0 : i32
    %173 = arith.cmpi ne, %arg0, %c0_i32 : i32
    %174 = arith.extui %173 : i1 to i32
    %c0_i32_63 = arith.constant 0 : i32
    %175 = arith.cmpi ne, %174, %c0_i32_63 : i32
    scf.if %175 {
      %179 = vector.shape_cast %172 : vector<8x128xf32> to vector<1x8x128xf32>
      %cst_66 = arith.constant dense<0.000000e+00> : vector<8x128xf32>
      %180 = vector.multi_reduction <add>, %179, %cst_66 [0] : vector<1x8x128xf32> to vector<8x128xf32>
      %c0_67 = arith.constant 0 : index
      %c0_68 = arith.constant 0 : index
      %c0_69 = arith.constant 0 : index
      %181 = vector.load %arg3[%c0_67, %c0_68, %c0_69] : memref<1x8x128xf32, #tpu.memory_space<vmem>>, vector<1x8x128xf32>
      %182 = vector.shape_cast %181 : vector<1x8x128xf32> to vector<8x128xf32>
      %183 = vector.shape_cast %180 : vector<8x128xf32> to vector<1x8x128xf32>
      tpu.vector_store %arg3[%c0_67, %c0_68, %c0_69], %183 {strides = array<i32>} : memref<1x8x128xf32, #tpu.memory_space<vmem>>, vector<1x8x128xf32>,
    } else {
    }
    %c0_i32_64 = arith.constant 0 : i32
    %176 = arith.cmpi eq, %arg0, %c0_i32_64 : i32
    %177 = arith.extui %176 : i1 to i32
    %c0_i32_65 = arith.constant 0 : i32
    %178 = arith.cmpi ne, %177, %c0_i32_65 : i32
    scf.if %178 {
      %179 = tpu.iota {dimensions = array<i32: 0>} : vector<8x128xi32>
      %180 = tpu.iota {dimensions = array<i32: 1>} : vector<8x128xi32>
      %c8_i32 = arith.constant 8 : i32
      %181 = arith.muli %arg0, %c8_i32 : i32
      %182 = vector.broadcast %181 : i32 to vector<8x128xi32>
      %183 = arith.addi %182, %179 : vector<8x128xi32>
      %c128_i32 = arith.constant 128 : i32
      %184 = vector.broadcast %c128_i32 : i32 to vector<8x128xi32>
      %185 = arith.muli %183, %184 : vector<8x128xi32>
      %186 = arith.addi %185, %180 : vector<8x128xi32>
      %c8_i32_66 = arith.constant 8 : i32
      %187 = vector.broadcast %c8_i32_66 : i32 to vector<8x128xi32>
      %188 = arith.cmpi slt, %186, %187 : vector<8x128xi32>
      %cst_67 = arith.constant 0.000000e+00 : f32
      %189 = vector.broadcast %cst_67 : f32 to vector<8x128xf32>
      %190 = arith.select %188, %172, %189 : vector<8x128xi1>, vector<8x128xf32>
      %191 = vector.shape_cast %190 : vector<8x128xf32> to vector<1x8x128xf32>
      %cst_68 = arith.constant dense<0.000000e+00> : vector<8x128xf32>
      %192 = vector.multi_reduction <add>, %191, %cst_68 [0] : vector<1x8x128xf32> to vector<8x128xf32>
      %c0_69 = arith.constant 0 : index
      %c0_70 = arith.constant 0 : index
      %c0_71 = arith.constant 0 : index
      %193 = vector.load %arg3[%c0_69, %c0_70, %c0_71] : memref<1x8x128xf32, #tpu.memory_space<vmem>>, vector<1x8x128xf32>
      %194 = vector.shape_cast %193 : vector<1x8x128xf32> to vector<8x128xf32>
      %195 = vector.shape_cast %192 : vector<8x128xf32> to vector<1x8x128xf32>
      tpu.vector_store %arg3[%c0_69, %c0_70, %c0_71], %195 {strides = array<i32>} : memref<1x8x128xf32, #tpu.memory_space<vmem>>, vector<1x8x128xf32>,
    } else {
    }
    return
  }
  func.func @transform_0(%arg0: i32) -> (i32, i32, i32) {
    %c0_i32 = arith.constant 0 : i32
    %c0_i32_0 = arith.constant 0 : i32
    %c0_i32_1 = arith.constant 0 : i32
    return %c0_i32, %arg0, %c0_i32_0 : i32, i32, i32
  }
  func.func @transform_1(%arg0: i32) -> (i32, i32) {
    %c0_i32 = arith.constant 0 : i32
    %c0_i32_0 = arith.constant 0 : i32
    return %arg0, %c0_i32 : i32, i32
  }
  func.func @transform_2(%arg0: i32) -> (i32, i32, i32) {
    %c0_i32 = arith.constant 0 : i32
    %c0_i32_0 = arith.constant 0 : i32
    %c0_i32_1 = arith.constant 0 : i32
    return %arg0, %c0_i32, %c0_i32_0 : i32, i32, i32
  }
}

</mosaic_0001>

<llo_original>
// kernel: tpu_custom_call.1
$region0: #{tpu_custom_call.1}
  #allocation0 [shape = 'u32[]', space=smem, size = 0x4, offset = 0x4, fixed_abs, tag = 'smem constant byte address 0x4 - core index']
  #allocation1 [shape = 'u32[144,128]{1,0:T(1,128)}', space=vmem, size = 0x12000, scoped, tag = 'internal scratch']
  %s0 = inlined_call_operand.hbm [shape: f32[4,8,128], index: 0, kind: input, shape index: {}]
  %s1 = inlined_call_operand.hbm [shape: f32[8,128], index: 1, kind: input, shape index: {}]
  %s2 = inlined_call_operand.hbm [shape: f32[1,8,128], index: 2, kind: output, shape index: {}]
  %s3 = sld [smem:[#allocation0]]
  $region34: #{tpu_custom_call.1} parent=0
    _
  %s5 = ssub.s32 1, %s3
  %s6 = scalar_select 0, %s5, %s3
  $region1: #{tpu_custom_call.1} parent=0
    #allocation2 [shape = 'u8[16384]{0}', space=vmem, size = 0x4000, scoped, tag = 'input window, operand 0, single buffered']
    #allocation3 [shape = 's32[1]{0}', space=sflag, size = 0x4, scoped, tag = 'scoped memory for tpu_custom_call.1']
    #allocation4 [shape = 's32[1]{0}', space=sflag, size = 0x4, scoped, tag = 'scoped memory for tpu_custom_call.1']
    #allocation5 [shape = 'u8[4096]{0}', space=vmem, size = 0x1000, scoped, tag = 'input window, operand 1, single buffered']
    #allocation6 [shape = 's32[1]{0}', space=sflag, size = 0x4, scoped, tag = 'scoped memory for tpu_custom_call.1']
    #allocation7 [shape = 'u8[4096]{0}', space=vmem, size = 0x1000, scoped, tag = 'output window, operand 0, single buffered']
    %7 = vsyncpa [#allocation3], 0
    %8 = vsyncpa [#allocation6], 0
    %9 = vsyncpa [#allocation4], 0
    // Predicated region
    $region2: #{tpu_custom_call.1} parent=1 // pred_check
      _
    $region3: #{tpu_custom_call.1} parent=1 // pred_check_branch
      %11 = sbr.rel (0) target = $region5
    $region4: #{tpu_custom_call.1} parent=1 // pred_region
      %s13 = ssub.s32 512, 512
      %14 = vsyncadd [#allocation3], %s13
      %s15 = sshll.u32 [#allocation2], 4
      %s16 = int_to_ptr.vmem [resolvable:$true] %s15
      %21 = dma.hbm_to_vmem [thread:$0]  %s0, 512, %s16, [#allocation3], 128, 128, 8
    $region5: #{tpu_custom_call.1} parent=1 // pred_fallthru
      _
    // Predicated region
    $region6: #{tpu_custom_call.1} parent=1 // pred_check
      _
    $region7: #{tpu_custom_call.1} parent=1 // pred_check_branch
      %23 = sbr.rel (0) target = $region9
    $region8: #{tpu_custom_call.1} parent=1 // pred_region
      %s25 = ssub.s32 128, 128
      %26 = vsyncadd [#allocation6], %s25
      %s28 = sshll.u32 [#allocation5], 4
      %s29 = int_to_ptr.vmem [resolvable:$true] %s28
      %31 = dma.hbm_to_vmem [thread:$0]  %s1, 128, %s29, [#allocation6]
    $region9: #{tpu_custom_call.1} parent=1 // pred_fallthru
      _
    // Predicated region
    $region10: #{tpu_custom_call.1} parent=1 // pred_check
      _
    $region11: #{tpu_custom_call.1} parent=1 // pred_check_branch
      %33 = sbr.rel (0) target = $region13
    $region12: #{tpu_custom_call.1} parent=1 // pred_region
      %34 = dma.done [#allocation3], 512
    $region13: #{tpu_custom_call.1} parent=1 // pred_fallthru
      _
    // Predicated region
    $region14: #{tpu_custom_call.1} parent=1 // pred_check
      _
    $region15: #{tpu_custom_call.1} parent=1 // pred_check_branch
      %36 = sbr.rel (0) target = $region17
    $region16: #{tpu_custom_call.1} parent=1 // pred_region
      %37 = dma.done [#allocation6], 128
    $region17: #{tpu_custom_call.1} parent=1 // pred_fallthru
      _
    %v38 = vld [vmem:[#allocation2] sm:$0xff]
    %s39 = scalar_lea.vmem [#allocation2], 8
    %v40 = vld [vmem:[%s39] sm:$0xff]
    %s41 = scalar_lea.vmem [#allocation2], 16
    %v42 = vld [vmem:[%s41] sm:$0xff]
    %s43 = scalar_lea.vmem [#allocation2], 24
    %v44 = vld [vmem:[%s43] sm:$0xff]
    %v45 = vld [vmem:[#allocation5] sm:$0xff]
    %v46 = vsub.f32 %v38, %v45
    %v47 = vmul.f32 %v44, 2.0
    %v48 = vadd.f32 %v40, 1.0
    %v49 = vmul.f32 %v47, %v48
    %v50 = vlog2.pop %v40
    %v51 = vmul.f32 %v50, 0.6931472
    %v52 = vmul.f32 %v51, 0.5
    %v53 = vsub.f32 0.5723649, %v52
    %v54 = vlog2.pop %v49
    %v55 = vmul.f32 %v54, 0.6931472
    %v56 = vmul.f32 %v42, %v55
    %v57 = vsub.f32 %v53, %v56
    %v58 = vadd.f32 %v42, 0.5
    %v59 = vmul.f32 %v46, %v46
    %v60 = vmul.f32 %v59, %v40
    %v61 = vadd.f32 %v60, %v49
    %v62 = vlog2.pop %v61
    %v63 = vmul.f32 %v62, 0.6931472
    %v64 = vmul.f32 %v58, %v63
    %v65 = vadd.f32 %v57, %v64
    %v66 = vsub.f32 %v42, 1.0
    %v67 = vmul.f32 %v66, 24.458334
    %v68 = vadd.f32 %v67, 1053.0425
    %v69 = vmul.f32 %v68, %v66
    %v70 = vadd.f32 %v69, 19629.51
    %v71 = vmul.f32 %v70, %v66
    %v72 = vadd.f32 %v71, 205786.22
    %v73 = vmul.f32 %v72, %v66
    %v74 = vadd.f32 %v73, 1312212.3
    %v75 = vmul.f32 %v74, %v66
    %v76 = vadd.f32 %v75, 5092745.0
    %v77 = vmul.f32 %v76, %v66
    %v78 = vadd.f32 %v77, 11137345.0
    %v79 = vmul.f32 %v78, %v66
    %v80 = vadd.f32 %v79, 10579290.0
    %v81 = vadd.f32 %v66, 36.0
    %v82 = vmul.f32 %v81, %v66
    %v83 = vadd.f32 %v82, 546.0
    %v84 = vmul.f32 %v83, %v66
    %v85 = vadd.f32 %v84, 4536.0
    %v86 = vmul.f32 %v85, %v66
    %v87 = vadd.f32 %v86, 22449.0
    %v88 = vmul.f32 %v87, %v66
    %v89 = vadd.f32 %v88, 67284.0
    %v90 = vmul.f32 %v89, %v66
    %v91 = vadd.f32 %v90, 118124.0
    %v92 = vmul.f32 %v91, %v66
    %v93 = vadd.f32 %v92, 109584.0
    %v94 = vmul.f32 %v93, %v66
    %v95 = vadd.f32 %v94, 40320.0
    %v96 = vrcp.pop %v95
    %v97 = vmul.f32 %v80, %v96
    %v98 = vadd.f32 %v97, 1.0
    %v99 = vadd.f32 %v66, 7.0
    %v100 = vadd.f32 %v99, 0.5
    %v101 = vadd.f32 %v66, 0.5
    %v102 = vlog2.pop %v100
    %v103 = vmul.f32 %v102, 0.6931472
    %v104 = vmul.f32 %v101, %v103
    %v105 = vadd.f32 %v104, 0.9189385
    %v106 = vsub.f32 %v105, %v100
    %v107 = vlog2.pop %v98
    %v108 = vmul.f32 %v107, 0.6931472
    %v109 = vadd.f32 %v106, %v108
    %v110 = vadd.f32 %v65, %v109
    %v111 = vsub.f32 %v58, 1.0
    %v112 = vmul.f32 %v111, 24.458334
    %v113 = vadd.f32 %v112, 1053.0425
    %v114 = vmul.f32 %v113, %v111
    %v115 = vadd.f32 %v114, 19629.51
    %v116 = vmul.f32 %v115, %v111
    %v117 = vadd.f32 %v116, 205786.22
    %v118 = vmul.f32 %v117, %v111
    %v119 = vadd.f32 %v118, 1312212.3
    %v120 = vmul.f32 %v119, %v111
    %v121 = vadd.f32 %v120, 5092745.0
    %v122 = vmul.f32 %v121, %v111
    %v123 = vadd.f32 %v122, 11137345.0
    %v124 = vmul.f32 %v123, %v111
    %v125 = vadd.f32 %v124, 10579290.0
    %v126 = vadd.f32 %v111, 36.0
    %v127 = vmul.f32 %v126, %v111
    %v128 = vadd.f32 %v127, 546.0
    %v129 = vmul.f32 %v128, %v111
    %v130 = vadd.f32 %v129, 4536.0
    %v131 = vmul.f32 %v130, %v111
    %v132 = vadd.f32 %v131, 22449.0
    %v133 = vmul.f32 %v132, %v111
    %v134 = vadd.f32 %v133, 67284.0
    %v135 = vmul.f32 %v134, %v111
    %v136 = vadd.f32 %v135, 118124.0
    %v137 = vmul.f32 %v136, %v111
    %v138 = vadd.f32 %v137, 109584.0
    %v139 = vmul.f32 %v138, %v111
    %v140 = vadd.f32 %v139, 40320.0
    %v141 = vrcp.pop %v140
    %v142 = vmul.f32 %v125, %v141
    %v143 = vadd.f32 %v142, 1.0
    %v144 = vadd.f32 %v111, 7.0
    %v145 = vadd.f32 %v144, 0.5
    %v146 = vadd.f32 %v111, 0.5
    %v147 = vlog2.pop %v145
    %v148 = vmul.f32 %v147, 0.6931472
    %v149 = vmul.f32 %v146, %v148
    %v150 = vadd.f32 %v149, 0.9189385
    %v151 = vsub.f32 %v150, %v145
    %v152 = vlog2.pop %v143
    %v153 = vmul.f32 %v152, 0.6931472
    %v154 = vadd.f32 %v151, %v153
    %v155 = vsub.f32 %v110, %v154
    %v156 = vand.u32 2147483647, %v46
    %v157 = vmul.f32 %v156, 0.01
    %v158 = vmul.f32 %v40, 2.0
    %v159 = vadd.f32 %v158, %v42
    %v160 = vmul.f32 %v157, %v159
    %v161 = vadd.f32 %v155, %v160
    %p162 = scmp.ne.s32.totalorder 0, 0
    // Predicated region
    $region18: #{tpu_custom_call.1} parent=1 // pred_check
      %p163 = pneg %p162
    $region19: #{tpu_custom_call.1} parent=1 // pred_check_branch
      %165 = sbr.rel (%p163) target = $region21
    $region20: #{tpu_custom_call.1} parent=1 // pred_region
      %v166 = vadd.f32 %v161, 0.0
      %167 = vst [vmem:[#allocation7] sm:$0xff] %v166
    $region21: #{tpu_custom_call.1} parent=1 // pred_fallthru
      _
    %p168 = scmp.eq.s32.totalorder 0, 0
    // Predicated region
    $region22: #{tpu_custom_call.1} parent=1 // pred_check
      %p169 = pneg %p168
    $region23: #{tpu_custom_call.1} parent=1 // pred_check_branch
      %171 = sbr.rel (%p169) target = $region25
    $region24: #{tpu_custom_call.1} parent=1 // pred_region
      %v172 = vlaneseq
      %v173 = vshrl.u32 %v172, 7
      %v174 = vlaneseq
      %v175 = vand.u32 %v174, 127
      %s176 = smul.u32 0, 8
      %v177 = vstv %s176
      %v178 = vadd.s32 %v177, %v173
      %v179 = vmul.u32 %v178, 128
      %v180 = vadd.s32 %v179, %v175
      %vm181 = vcmp.lt.s32.totalorder %v180, 8
      %v182 = vsel %vm181, %v161, 0.0
      %v183 = vadd.f32 %v182, 0.0
      %184 = vst [vmem:[#allocation7] sm:$0xff] %v183
    $region25: #{tpu_custom_call.1} parent=1 // pred_fallthru
      _
    // Predicated region
    $region26: #{tpu_custom_call.1} parent=1 // pred_check
      _
    $region27: #{tpu_custom_call.1} parent=1 // pred_check_branch
      %186 = sbr.rel (0) target = $region29
    $region28: #{tpu_custom_call.1} parent=1 // pred_region
      %s188 = ssub.s32 128, 128
      %189 = vsyncadd [#allocation4], %s188
      %s191 = sshll.u32 [#allocation7], 4
      %s192 = int_to_ptr.vmem [resolvable:$true] %s191
      %194 = dma.vmem_to_hbm [thread:$0]  %s192, 128, %s2, [#allocation4]
    $region29: #{tpu_custom_call.1} parent=1 // pred_fallthru
      _
    // Predicated region
    $region30: #{tpu_custom_call.1} parent=1 // pred_check
      _
    $region31: #{tpu_custom_call.1} parent=1 // pred_check_branch
      %196 = sbr.rel (0) target = $region33
    $region32: #{tpu_custom_call.1} parent=1 // pred_region
      %197 = dma.done [#allocation4], 128
    $region33: #{tpu_custom_call.1} parent=1 // pred_fallthru
      _
    %198 = vsyncpa [#allocation3], 1
    %199 = vsyncpa [#allocation6], 1
    %200 = vsyncpa [#allocation4], 1

</llo_original>
